<compile_context>
chip_gen: v5e
topology: v5e:2x2
jax: 0.10.0
libtpu: 0.0.40
codegen_flags: <defaults>
</compile_context>

<pallas_src>
import functools

import jax
import jax.numpy as jnp
from jax.experimental import pallas as pl
from jax.experimental.pallas import tpu as pltpu

EPSILON = 2e-07


def _sar_kernel(p_ref, t_ref, n_ref, pred_acc_ref, proj_acc_ref,
                *, inv_t2, fold_rows):
    """Process one (block_b, T) slab: row statistics + partial-sum fold."""
    j = pl.program_id(1)  # sequential ("arbitrary") axis

    @pl.when(j == 0)
    def _init():
        pred_acc_ref[...] = jnp.zeros_like(pred_acc_ref)
        proj_acc_ref[...] = jnp.zeros_like(proj_acc_ref)

    p = p_ref[...].astype(jnp.float32)
    t = t_ref[...].astype(jnp.float32)
    n = n_ref[...].astype(jnp.float32)

    # Per-row sums over the full T axis (PyTorch dim=1, keepdim=True).
    # NOTE: correctness requires the block to span the entire row.
    s_nn = jnp.sum(n * n, axis=1, keepdims=True)   # sum(interference**2)
    s_tt = jnp.sum(t * t, axis=1, keepdims=True)   # sum(target**2)
    s_pt = jnp.sum(p * t, axis=1, keepdims=True)   # sum(pred * target)
    s_pn = jnp.sum(p * n, axis=1, keepdims=True)   # sum(pred * interference)

    # Fold the 1/T of each mean into the (block_b, 1) row scalars instead of
    # four full-tile broadcast divides.
    c1 = (s_nn * s_pt) * inv_t2
    c2 = (s_tt * s_pn) * inv_t2
    project = c1 * t + c2 * n

    bb, tt = p.shape

    def _fold(x):
        # Fold (bb, T) -> (fold_rows, T) partial sums with pure VPU adds;
        # defer the expensive cross-lane collapse to outside the kernel.
        if fold_rows == 8 and bb % 8 == 0:
            return x.reshape(bb // 8, 8, tt).sum(axis=0)
        return jnp.sum(x, axis=0, keepdims=True)

    pred_acc_ref[...] += _fold(p * p)
    proj_acc_ref[...] += _fold(project * project)


def _vmem_limit_bytes():
    """Scoped-VMEM budget: ~75% of physical, capped at 96 MiB (v5e/v6e)."""
    try:
        cap = pltpu.get_tpu_info().vmem_capacity_bytes
    except Exception:
        cap = 64 * 1024 * 1024  # conservative (v7x-sized) fallback
    return int(min(cap * 3 // 4, 96 * 1024 * 1024))


def _pick_block_b(B, T, itemsize, vmem_limit):
    """Largest batch tile that fits the VMEM budget, is sublane-aligned for
    the input dtype, and divides B."""
    align = max(8, 32 // itemsize)          # f32: 8, bf16: 16, int8/fp8: 32
    # Per-row VMEM: 3 inputs x 2 pipeline buffers (native dtype)
    #             + ~6 f32-sized temporaries (upcasts, project, squares).
    per_row = 3 * 2 * T * itemsize + 6 * T * 4
    budget = int(vmem_limit * 0.7)
    max_bb = max(align, (budget // per_row) // align * align)
    if B <= max_bb:
        return B
    bb = max_bb
    while bb >= align:
        if B % bb == 0:
            return bb
        bb -= align
    # TODO(synk): B > max_bb and B not a multiple of `align` — fall back to any
    # divisor; a padded-last-block (or two-level T) variant is the clean fix.
    bb = max_bb
    while bb > 1:
        if B % bb == 0:
            return bb
        bb -= 1
    return 1


def signal_artifact_ratio(prediction, target, interference, *, epsilon=EPSILON):
    """Pallas implementation of SignalArtifactRatio.forward. Returns a scalar."""
    assert prediction.shape == target.shape == interference.shape
    B, T = prediction.shape
    itemsize = jnp.dtype(prediction.dtype).itemsize

    vmem_limit = _vmem_limit_bytes()
    block_b = _pick_block_b(B, T, itemsize, vmem_limit)
    num_blocks = B // block_b
    fold_rows = 8 if block_b % 8 == 0 else 1

    # Leading "parallel" axis: lets v7x shard blocks across its 2 TensorCores,
    # each accumulating into its own output slab; harmless on v5e/v6e.
    num_cores = 2 if (fold_rows == 8 and num_blocks >= 2
                      and num_blocks % 2 == 0) else 1
    blocks_per_core = num_blocks // num_cores

    in_spec = pl.BlockSpec(
        (block_b, T), lambda c, j: (c * blocks_per_core + j, 0))
    acc_spec = pl.BlockSpec((fold_rows, T), lambda c, j: (c, 0))

    kernel = functools.partial(
        _sar_kernel, inv_t2=1.0 / (float(T) * float(T)), fold_rows=fold_rows)

    out_pred, out_proj = pl.pallas_call(
        kernel,
        out_shape=(
            jax.ShapeDtypeStruct((num_cores * fold_rows, T), jnp.float32),
            jax.ShapeDtypeStruct((num_cores * fold_rows, T), jnp.float32),
        ),
        grid_spec=pltpu.PrefetchScalarGridSpec(
            num_scalar_prefetch=0,
            grid=(num_cores, blocks_per_core),
            in_specs=[in_spec, in_spec, in_spec],
            out_specs=[acc_spec, acc_spec],
        ),
        compiler_params=pltpu.CompilerParams(
            dimension_semantics=("parallel", "arbitrary"),
            vmem_limit_bytes=vmem_limit),
    )(prediction, target, interference)

    # Final (tiny) cross-lane collapse + SAR division outside the kernel.
    total = float(B * T)
    sum_pred2 = jnp.sum(out_pred)
    sum_proj2 = jnp.sum(out_proj)
    return (sum_pred2 / total) / (sum_proj2 / total + epsilon)


def signal_artifact_ratio_ref(prediction, target, interference,
                              epsilon=EPSILON):
    """Pure-JAX reference mirroring the PyTorch module exactly."""
    inter_norm = jnp.mean(interference ** 2, axis=1, keepdims=True)
    target_norm = jnp.mean(target ** 2, axis=1, keepdims=True)
    ref_correlation = jnp.mean(prediction * target, axis=1, keepdims=True)
    inter_correlation = jnp.mean(prediction * interference, axis=1,
                                 keepdims=True)
    project = (inter_norm * ref_correlation * target
               + target_norm * inter_correlation * interference)
    return jnp.mean(prediction ** 2) / (jnp.mean(project ** 2) + epsilon)


if __name__ == "__main__":
    B, T = 16, 512
    key = jax.random.PRNGKey(0)
    kp, kt, kn = jax.random.split(key, 3)
    prediction = jax.random.normal(kp, (B, T), dtype=jnp.float32)
    target = jax.random.normal(kt, (B, T), dtype=jnp.float32)
    interference = jax.random.normal(kn, (B, T), dtype=jnp.float32)

    sar = jax.block_until_ready(
        signal_artifact_ratio(prediction, target, interference))
    sar_ref = signal_artifact_ratio_ref(prediction, target, interference)
    assert jnp.allclose(sar, sar_ref, rtol=1e-4, atol=1e-6), (sar, sar_ref)

    print("KERNEL_OK")
</pallas_src>

<mosaic_0001>
module attributes {stable_mosaic.version = 11 : i64} {
  func.func @_sar_kernel(%arg0: i32, %arg1: i32, %arg2: memref<16x512xf32, #tpu.memory_space<vmem>>, %arg3: memref<16x512xf32, #tpu.memory_space<vmem>>, %arg4: memref<16x512xf32, #tpu.memory_space<vmem>>, %arg5: memref<8x512xf32, #tpu.memory_space<vmem>>, %arg6: memref<8x512xf32, #tpu.memory_space<vmem>>) attributes {dimension_semantics = [#tpu.dimension_semantics<parallel>, #tpu.dimension_semantics<arbitrary>], iteration_bounds = array<i64: 1, 1>, scalar_prefetch = 0 : i64, scratch_operands = 0 : i64, tpu.core_type = #tpu.core_type<tc>, window_params = [{transform_indices = @transform_0, window_bounds = array<i64: 16, 512>}, {transform_indices = @transform_1, window_bounds = array<i64: 16, 512>}, {transform_indices = @transform_2, window_bounds = array<i64: 16, 512>}, {transform_indices = @transform_3, window_bounds = array<i64: 8, 512>}, {transform_indices = @transform_4, window_bounds = array<i64: 8, 512>}]} {
    %c0_i32 = arith.constant 0 : i32
    %0 = arith.cmpi eq, %arg1, %c0_i32 : i32
    %1 = arith.extui %0 : i1 to i32
    %c0_i32_0 = arith.constant 0 : i32
    %2 = arith.cmpi ne, %1, %c0_i32_0 : i32
    scf.if %2 {
      %cst_21 = arith.constant 0.000000e+00 : f32
      %41 = vector.broadcast %cst_21 : f32 to vector<8x512xf32>
      %c0_22 = arith.constant 0 : index
      %c0_23 = arith.constant 0 : index
      %42 = vector.load %arg5[%c0_22, %c0_23] : memref<8x512xf32, #tpu.memory_space<vmem>>, vector<8x512xf32>
      tpu.vector_store %arg5[%c0_22, %c0_23], %41 {strides = array<i32>} : memref<8x512xf32, #tpu.memory_space<vmem>>, vector<8x512xf32>,
      %cst_24 = arith.constant 0.000000e+00 : f32
      %43 = vector.broadcast %cst_24 : f32 to vector<8x512xf32>
      %c0_25 = arith.constant 0 : index
      %c0_26 = arith.constant 0 : index
      %44 = vector.load %arg6[%c0_25, %c0_26] : memref<8x512xf32, #tpu.memory_space<vmem>>, vector<8x512xf32>
      tpu.vector_store %arg6[%c0_25, %c0_26], %43 {strides = array<i32>} : memref<8x512xf32, #tpu.memory_space<vmem>>, vector<8x512xf32>,
    } else {
    }
    %c0 = arith.constant 0 : index
    %c0_1 = arith.constant 0 : index
    %3 = vector.load %arg2[%c0, %c0_1] : memref<16x512xf32, #tpu.memory_space<vmem>>, vector<16x512xf32>
    %c0_2 = arith.constant 0 : index
    %c0_3 = arith.constant 0 : index
    %4 = vector.load %arg3[%c0_2, %c0_3] : memref<16x512xf32, #tpu.memory_space<vmem>>, vector<16x512xf32>
    %c0_4 = arith.constant 0 : index
    %c0_5 = arith.constant 0 : index
    %5 = vector.load %arg4[%c0_4, %c0_5] : memref<16x512xf32, #tpu.memory_space<vmem>>, vector<16x512xf32>
    %6 = arith.mulf %5, %5 : vector<16x512xf32>
    %cst = arith.constant dense<0.000000e+00> : vector<16xf32>
    %7 = vector.multi_reduction <add>, %6, %cst [1] : vector<16x512xf32> to vector<16xf32>
    %8 = vector.shape_cast %7 : vector<16xf32> to vector<16x1xf32>
    %9 = arith.mulf %4, %4 : vector<16x512xf32>
    %cst_6 = arith.constant dense<0.000000e+00> : vector<16xf32>
    %10 = vector.multi_reduction <add>, %9, %cst_6 [1] : vector<16x512xf32> to vector<16xf32>
    %11 = vector.shape_cast %10 : vector<16xf32> to vector<16x1xf32>
    %12 = arith.mulf %3, %4 : vector<16x512xf32>
    %cst_7 = arith.constant dense<0.000000e+00> : vector<16xf32>
    %13 = vector.multi_reduction <add>, %12, %cst_7 [1] : vector<16x512xf32> to vector<16xf32>
    %14 = vector.shape_cast %13 : vector<16xf32> to vector<16x1xf32>
    %15 = arith.mulf %3, %5 : vector<16x512xf32>
    %cst_8 = arith.constant dense<0.000000e+00> : vector<16xf32>
    %16 = vector.multi_reduction <add>, %15, %cst_8 [1] : vector<16x512xf32> to vector<16xf32>
    %17 = vector.shape_cast %16 : vector<16xf32> to vector<16x1xf32>
    %18 = arith.mulf %8, %14 : vector<16x1xf32>
    %cst_9 = arith.constant 3.81469727E-6 : f32
    %19 = vector.broadcast %cst_9 : f32 to vector<16x1xf32>
    %20 = arith.mulf %18, %19 : vector<16x1xf32>
    %21 = arith.mulf %11, %17 : vector<16x1xf32>
    %cst_10 = arith.constant 3.81469727E-6 : f32
    %22 = vector.broadcast %cst_10 : f32 to vector<16x1xf32>
    %23 = arith.mulf %21, %22 : vector<16x1xf32>
    %24 = vector.broadcast %20 : vector<16x1xf32> to vector<16x512xf32>
    %25 = arith.mulf %24, %4 : vector<16x512xf32>
    %26 = vector.broadcast %23 : vector<16x1xf32> to vector<16x512xf32>
    %27 = arith.mulf %26, %5 : vector<16x512xf32>
    %28 = arith.addf %25, %27 : vector<16x512xf32>
    %c0_11 = arith.constant 0 : index
    %c0_12 = arith.constant 0 : index
    %29 = vector.load %arg5[%c0_11, %c0_12] : memref<8x512xf32, #tpu.memory_space<vmem>>, vector<8x512xf32>
    %30 = arith.mulf %3, %3 : vector<16x512xf32>
    %31 = vector.shape_cast %30 : vector<16x512xf32> to vector<2x8x512xf32>
    %cst_13 = arith.constant dense<0.000000e+00> : vector<8x512xf32>
    %32 = vector.multi_reduction <add>, %31, %cst_13 [0] : vector<2x8x512xf32> to vector<8x512xf32>
    %33 = arith.addf %29, %32 : vector<8x512xf32>
    %c0_14 = arith.constant 0 : index
    %c0_15 = arith.constant 0 : index
    %34 = vector.load %arg5[%c0_14, %c0_15] : memref<8x512xf32, #tpu.memory_space<vmem>>, vector<8x512xf32>
    tpu.vector_store %arg5[%c0_14, %c0_15], %33 {strides = array<i32>} : memref<8x512xf32, #tpu.memory_space<vmem>>, vector<8x512xf32>,
    %c0_16 = arith.constant 0 : index
    %c0_17 = arith.constant 0 : index
    %35 = vector.load %arg6[%c0_16, %c0_17] : memref<8x512xf32, #tpu.memory_space<vmem>>, vector<8x512xf32>
    %36 = arith.mulf %28, %28 : vector<16x512xf32>
    %37 = vector.shape_cast %36 : vector<16x512xf32> to vector<2x8x512xf32>
    %cst_18 = arith.constant dense<0.000000e+00> : vector<8x512xf32>
    %38 = vector.multi_reduction <add>, %37, %cst_18 [0] : vector<2x8x512xf32> to vector<8x512xf32>
    %39 = arith.addf %35, %38 : vector<8x512xf32>
    %c0_19 = arith.constant 0 : index
    %c0_20 = arith.constant 0 : index
    %40 = vector.load %arg6[%c0_19, %c0_20] : memref<8x512xf32, #tpu.memory_space<vmem>>, vector<8x512xf32>
    tpu.vector_store %arg6[%c0_19, %c0_20], %39 {strides = array<i32>} : memref<8x512xf32, #tpu.memory_space<vmem>>, vector<8x512xf32>,
    return
  }
  func.func @transform_0(%arg0: i32, %arg1: i32) -> (i32, i32) {
    %c1_i32 = arith.constant 1 : i32
    %0 = arith.muli %arg0, %c1_i32 : i32
    %1 = arith.addi %0, %arg1 : i32
    %c0_i32 = arith.constant 0 : i32
    %c0_i32_0 = arith.constant 0 : i32
    return %1, %c0_i32 : i32, i32
  }
  func.func @transform_1(%arg0: i32, %arg1: i32) -> (i32, i32) {
    %c1_i32 = arith.constant 1 : i32
    %0 = arith.muli %arg0, %c1_i32 : i32
    %1 = arith.addi %0, %arg1 : i32
    %c0_i32 = arith.constant 0 : i32
    %c0_i32_0 = arith.constant 0 : i32
    return %1, %c0_i32 : i32, i32
  }
  func.func @transform_2(%arg0: i32, %arg1: i32) -> (i32, i32) {
    %c1_i32 = arith.constant 1 : i32
    %0 = arith.muli %arg0, %c1_i32 : i32
    %1 = arith.addi %0, %arg1 : i32
    %c0_i32 = arith.constant 0 : i32
    %c0_i32_0 = arith.constant 0 : i32
    return %1, %c0_i32 : i32, i32
  }
  func.func @transform_3(%arg0: i32, %arg1: i32) -> (i32, i32) {
    %c0_i32 = arith.constant 0 : i32
    %c0_i32_0 = arith.constant 0 : i32
    return %arg0, %c0_i32 : i32, i32
  }
  func.func @transform_4(%arg0: i32, %arg1: i32) -> (i32, i32) {
    %c0_i32 = arith.constant 0 : i32
    %c0_i32_0 = arith.constant 0 : i32
    return %arg0, %c0_i32 : i32, i32
  }
}

</mosaic_0001>

<llo_original>
// kernel: tpu_custom_call.1
$region0: #{tpu_custom_call.1}
  #allocation0 [shape = 'u32[]', space=smem, size = 0x4, offset = 0x4, fixed_abs, tag = 'smem constant byte address 0x4 - core index']
  #allocation1 [shape = 'u32[72,128]{1,0:T(1,128)}', space=vmem, size = 0x9000, scoped, tag = 'internal scratch']
  %s0 = inlined_call_operand.hbm [shape: f32[16,512], index: 0, kind: input, shape index: {}]
  %s1 = inlined_call_operand.hbm [shape: f32[16,512], index: 1, kind: input, shape index: {}]
  %s2 = inlined_call_operand.hbm [shape: f32[16,512], index: 2, kind: input, shape index: {}]
  %s3 = inlined_call_operand.hbm [shape: f32[8,512], index: 3, kind: output, shape index: {0}]
  %s4 = inlined_call_operand.hbm [shape: f32[8,512], index: 4, kind: output, shape index: {1}]
  %5 = xla_tuple %s3, %s4
  %s6 = sld [smem:[#allocation0]]
  $region46: #{tpu_custom_call.1} parent=0
    _
  %s8 = ssub.s32 1, %s6
  %s9 = scalar_select 0, %s8, %s6
  $region1: #{tpu_custom_call.1} parent=0
    #allocation2 [shape = 'u8[32768]{0}', space=vmem, size = 0x8000, scoped, tag = 'input window, operand 0, single buffered']
    #allocation3 [shape = 's32[1]{0}', space=sflag, size = 0x4, scoped, tag = 'scoped memory for tpu_custom_call.1']
    #allocation4 [shape = 's32[1]{0}', space=sflag, size = 0x4, scoped, tag = 'scoped memory for tpu_custom_call.1']
    #allocation5 [shape = 'u8[32768]{0}', space=vmem, size = 0x8000, scoped, tag = 'input window, operand 1, single buffered']
    #allocation6 [shape = 's32[1]{0}', space=sflag, size = 0x4, scoped, tag = 'scoped memory for tpu_custom_call.1']
    #allocation7 [shape = 'u8[32768]{0}', space=vmem, size = 0x8000, scoped, tag = 'input window, operand 2, single buffered']
    #allocation8 [shape = 'u8[16384]{0}', space=vmem, size = 0x4000, scoped, tag = 'output window, operand 0, single buffered']
    #allocation9 [shape = 'u8[16384]{0}', space=vmem, size = 0x4000, scoped, tag = 'output window, operand 1, single buffered']
    #allocation10 [shape = 's32[1]{0}', space=sflag, size = 0x4, scoped, tag = 'scoped memory for tpu_custom_call.1']
    %10 = vsyncpa [#allocation3], 0
    %11 = vsyncpa [#allocation6], 0
    %12 = vsyncpa [#allocation4], 0
    %13 = vsyncpa [#allocation10], 0
    // Predicated region
    $region2: #{tpu_custom_call.1} parent=1 // pred_check
      _
    $region3: #{tpu_custom_call.1} parent=1 // pred_check_branch
      %15 = sbr.rel (0) target = $region5
    $region4: #{tpu_custom_call.1} parent=1 // pred_region
      %s16 = sadd.s32 0, 0
      %s17 = smul.u32 2, %s16
      %19 = vsyncadd [#allocation3], 0
      %s20 = smul.addr %s17, 4
      %s21 = smul.addr %s20, 8
      %s22 = scalar_lea.hbm %s0, %s21
      %s23 = sshll.u32 %s22, 4
      %s24 = int_to_ptr.hbm [resolvable:$true] %s23
      %s25 = sshll.u32 [#allocation2], 4
      %s26 = int_to_ptr.vmem [resolvable:$true] %s25
      %31 = dma.hbm_to_vmem [thread:$0]  %s24, 1024, %s26, [#allocation3], 512, 512, 32
    $region5: #{tpu_custom_call.1} parent=1 // pred_fallthru
      _
    // Predicated region
    $region6: #{tpu_custom_call.1} parent=1 // pred_check
      _
    $region7: #{tpu_custom_call.1} parent=1 // pred_check_branch
      %33 = sbr.rel (0) target = $region9
    $region8: #{tpu_custom_call.1} parent=1 // pred_region
      %s34 = sadd.s32 0, 0
      %s35 = smul.u32 2, %s34
      %37 = vsyncadd [#allocation6], 0
      %s38 = smul.addr %s35, 4
      %s39 = smul.addr %s38, 8
      %s40 = scalar_lea.hbm %s1, %s39
      %s41 = sshll.u32 %s40, 4
      %s42 = int_to_ptr.hbm [resolvable:$true] %s41
      %s43 = sshll.u32 [#allocation5], 4
      %s44 = int_to_ptr.vmem [resolvable:$true] %s43
      %49 = dma.hbm_to_vmem [thread:$0]  %s42, 1024, %s44, [#allocation6], 512, 512, 32
    $region9: #{tpu_custom_call.1} parent=1 // pred_fallthru
      _
    // Predicated region
    $region10: #{tpu_custom_call.1} parent=1 // pred_check
      _
    $region11: #{tpu_custom_call.1} parent=1 // pred_check_branch
      %51 = sbr.rel (0) target = $region13
    $region12: #{tpu_custom_call.1} parent=1 // pred_region
      %s52 = sadd.s32 0, 0
      %s53 = smul.u32 2, %s52
      %55 = vsyncadd [#allocation6], 0
      %s56 = smul.addr %s53, 4
      %s57 = smul.addr %s56, 8
      %s58 = scalar_lea.hbm %s2, %s57
      %s59 = sshll.u32 %s58, 4
      %s60 = int_to_ptr.hbm [resolvable:$true] %s59
      %s61 = sshll.u32 [#allocation7], 4
      %s62 = int_to_ptr.vmem [resolvable:$true] %s61
      %67 = dma.hbm_to_vmem [thread:$0]  %s60, 1024, %s62, [#allocation6], 512, 512, 32
    $region13: #{tpu_custom_call.1} parent=1 // pred_fallthru
      _
    // Predicated region
    $region14: #{tpu_custom_call.1} parent=1 // pred_check
      _
    $region15: #{tpu_custom_call.1} parent=1 // pred_check_branch
      %69 = sbr.rel (0) target = $region17
    $region16: #{tpu_custom_call.1} parent=1 // pred_region
      %71 = dma.done [#allocation3], 1024
    $region17: #{tpu_custom_call.1} parent=1 // pred_fallthru
      _
    // Predicated region
    $region18: #{tpu_custom_call.1} parent=1 // pred_check
      _
    $region19: #{tpu_custom_call.1} parent=1 // pred_check_branch
      %73 = sbr.rel (0) target = $region21
    $region20: #{tpu_custom_call.1} parent=1 // pred_region
      %75 = dma.done [#allocation6], 1024
    $region21: #{tpu_custom_call.1} parent=1 // pred_fallthru
      _
    // Predicated region
    $region22: #{tpu_custom_call.1} parent=1 // pred_check
      _
    $region23: #{tpu_custom_call.1} parent=1 // pred_check_branch
      %77 = sbr.rel (0) target = $region25
    $region24: #{tpu_custom_call.1} parent=1 // pred_region
      %79 = dma.done [#allocation6], 1024
    $region25: #{tpu_custom_call.1} parent=1 // pred_fallthru
      _
    %s80 = sadd.s32 0, 0
    %s81 = smul.u32 2, %s80
    %s82 = sadd.s32 0, 0
    %s83 = smul.u32 2, %s82
    %s84 = sadd.s32 0, 0
    %s85 = smul.u32 2, %s84
    %p86 = scmp.eq.s32.totalorder 0, 0
    // Predicated region
    $region26: #{tpu_custom_call.1} parent=1 // pred_check
      %p87 = pneg %p86
    $region27: #{tpu_custom_call.1} parent=1 // pred_check_branch
      %89 = sbr.rel (%p87) target = $region29
    $region28: #{tpu_custom_call.1} parent=1 // pred_region
      %90 = vst [vmem:[#allocation8] sm:$0xff] 0.0
      %91 = vst [vmem:[#allocation8 + $0x8] sm:$0xff] 0.0
      %92 = vst [vmem:[#allocation8 + $0x10] sm:$0xff] 0.0
      %93 = vst [vmem:[#allocation8 + $0x18] sm:$0xff] 0.0
      %94 = vst [vmem:[#allocation9] sm:$0xff] 0.0
      %95 = vst [vmem:[#allocation9 + $0x8] sm:$0xff] 0.0
      %96 = vst [vmem:[#allocation9 + $0x10] sm:$0xff] 0.0
      %97 = vst [vmem:[#allocation9 + $0x18] sm:$0xff] 0.0
    $region29: #{tpu_custom_call.1} parent=1 // pred_fallthru
      _
    %v98 = vld [vmem:[#allocation2] sm:$0xff]
    %v99 = vld [vmem:[#allocation2 + $0x8] sm:$0xff]
    %v100 = vld [vmem:[#allocation2 + $0x10] sm:$0xff]
    %v101 = vld [vmem:[#allocation2 + $0x18] sm:$0xff]
    %v102 = vld [vmem:[#allocation2 + $0x20] sm:$0xff]
    %v103 = vld [vmem:[#allocation2 + $0x28] sm:$0xff]
    %v104 = vld [vmem:[#allocation2 + $0x30] sm:$0xff]
    %v105 = vld [vmem:[#allocation2 + $0x38] sm:$0xff]
    %v106 = vld [vmem:[#allocation5] sm:$0xff]
    %v107 = vld [vmem:[#allocation5 + $0x8] sm:$0xff]
    %v108 = vld [vmem:[#allocation5 + $0x10] sm:$0xff]
    %v109 = vld [vmem:[#allocation5 + $0x18] sm:$0xff]
    %v110 = vld [vmem:[#allocation5 + $0x20] sm:$0xff]
    %v111 = vld [vmem:[#allocation5 + $0x28] sm:$0xff]
    %v112 = vld [vmem:[#allocation5 + $0x30] sm:$0xff]
    %v113 = vld [vmem:[#allocation5 + $0x38] sm:$0xff]
    %v114 = vld [vmem:[#allocation7] sm:$0xff]
    %v115 = vld [vmem:[#allocation7 + $0x8] sm:$0xff]
    %v116 = vld [vmem:[#allocation7 + $0x10] sm:$0xff]
    %v117 = vld [vmem:[#allocation7 + $0x18] sm:$0xff]
    %v118 = vld [vmem:[#allocation7 + $0x20] sm:$0xff]
    %v119 = vld [vmem:[#allocation7 + $0x28] sm:$0xff]
    %v120 = vld [vmem:[#allocation7 + $0x30] sm:$0xff]
    %v121 = vld [vmem:[#allocation7 + $0x38] sm:$0xff]
    %v122 = vmul.f32 %v114, %v114
    %v123 = vmul.f32 %v115, %v115
    %v124 = vmul.f32 %v116, %v116
    %v125 = vmul.f32 %v117, %v117
    %v126 = vmul.f32 %v118, %v118
    %v127 = vmul.f32 %v119, %v119
    %v128 = vmul.f32 %v120, %v120
    %v129 = vmul.f32 %v121, %v121
    %v130 = vadd.f32 %v122, %v123
    %v131 = vadd.f32 %v130, %v124
    %v132 = vadd.f32 %v131, %v125
    %133 = vadd.xlane.f32.xlu0 %v132
    %v134 = vpop.xlane.xlu0 %133
    %v135 = vadd.f32 %v126, %v127
    %v136 = vadd.f32 %v135, %v128
    %v137 = vadd.f32 %v136, %v129
    %138 = vadd.xlane.f32.xlu0 %v137
    %v139 = vpop.xlane.xlu0 %138
    %v140 = vmul.f32 %v106, %v106
    %v141 = vmul.f32 %v107, %v107
    %v142 = vmul.f32 %v108, %v108
    %v143 = vmul.f32 %v109, %v109
    %v144 = vmul.f32 %v110, %v110
    %v145 = vmul.f32 %v111, %v111
    %v146 = vmul.f32 %v112, %v112
    %v147 = vmul.f32 %v113, %v113
    %v148 = vadd.f32 %v140, %v141
    %v149 = vadd.f32 %v148, %v142
    %v150 = vadd.f32 %v149, %v143
    %151 = vadd.xlane.f32.xlu0 %v150
    %v152 = vpop.xlane.xlu0 %151
    %v153 = vadd.f32 %v144, %v145
    %v154 = vadd.f32 %v153, %v146
    %v155 = vadd.f32 %v154, %v147
    %156 = vadd.xlane.f32.xlu0 %v155
    %v157 = vpop.xlane.xlu0 %156
    %v158 = vmul.f32 %v98, %v106
    %v159 = vmul.f32 %v99, %v107
    %v160 = vmul.f32 %v100, %v108
    %v161 = vmul.f32 %v101, %v109
    %v162 = vmul.f32 %v102, %v110
    %v163 = vmul.f32 %v103, %v111
    %v164 = vmul.f32 %v104, %v112
    %v165 = vmul.f32 %v105, %v113
    %v166 = vadd.f32 %v158, %v159
    %v167 = vadd.f32 %v166, %v160
    %v168 = vadd.f32 %v167, %v161
    %169 = vadd.xlane.f32.xlu0 %v168
    %v170 = vpop.xlane.xlu0 %169
    %v171 = vadd.f32 %v162, %v163
    %v172 = vadd.f32 %v171, %v164
    %v173 = vadd.f32 %v172, %v165
    %174 = vadd.xlane.f32.xlu0 %v173
    %v175 = vpop.xlane.xlu0 %174
    %v176 = vmul.f32 %v98, %v114
    %v177 = vmul.f32 %v99, %v115
    %v178 = vmul.f32 %v100, %v116
    %v179 = vmul.f32 %v101, %v117
    %v180 = vmul.f32 %v102, %v118
    %v181 = vmul.f32 %v103, %v119
    %v182 = vmul.f32 %v104, %v120
    %v183 = vmul.f32 %v105, %v121
    %v184 = vadd.f32 %v176, %v177
    %v185 = vadd.f32 %v184, %v178
    %v186 = vadd.f32 %v185, %v179
    %187 = vadd.xlane.f32.xlu0 %v186
    %v188 = vpop.xlane.xlu0 %187
    %v189 = vadd.f32 %v180, %v181
    %v190 = vadd.f32 %v189, %v182
    %v191 = vadd.f32 %v190, %v183
    %192 = vadd.xlane.f32.xlu0 %v191
    %v193 = vpop.xlane.xlu0 %192
    %v194 = vmul.f32 %v134, %v170
    %v195 = vmul.f32 %v139, %v175
    %v196 = vmul.f32 %v194, 3.8146973e-06
    %v197 = vmul.f32 %v195, 3.8146973e-06
    %v198 = vmul.f32 %v152, %v188
    %v199 = vmul.f32 %v157, %v193
    %v200 = vmul.f32 %v198, 3.8146973e-06
    %v201 = vmul.f32 %v199, 3.8146973e-06
    %v202 = vmul.f32 %v196, %v106
    %v203 = vmul.f32 %v196, %v107
    %v204 = vmul.f32 %v196, %v108
    %v205 = vmul.f32 %v196, %v109
    %v206 = vmul.f32 %v197, %v110
    %v207 = vmul.f32 %v197, %v111
    %v208 = vmul.f32 %v197, %v112
    %v209 = vmul.f32 %v197, %v113
    %v210 = vmul.f32 %v200, %v114
    %v211 = vmul.f32 %v200, %v115
    %v212 = vmul.f32 %v200, %v116
    %v213 = vmul.f32 %v200, %v117
    %v214 = vmul.f32 %v201, %v118
    %v215 = vmul.f32 %v201, %v119
    %v216 = vmul.f32 %v201, %v120
    %v217 = vmul.f32 %v201, %v121
    %v218 = vadd.f32 %v202, %v210
    %v219 = vadd.f32 %v203, %v211
    %v220 = vadd.f32 %v204, %v212
    %v221 = vadd.f32 %v205, %v213
    %v222 = vadd.f32 %v206, %v214
    %v223 = vadd.f32 %v207, %v215
    %v224 = vadd.f32 %v208, %v216
    %v225 = vadd.f32 %v209, %v217
    %v226 = vld [vmem:[#allocation8] sm:$0xff]
    %v227 = vld [vmem:[#allocation8 + $0x8] sm:$0xff]
    %v228 = vld [vmem:[#allocation8 + $0x10] sm:$0xff]
    %v229 = vld [vmem:[#allocation8 + $0x18] sm:$0xff]
    %v230 = vmul.f32 %v98, %v98
    %v231 = vmul.f32 %v99, %v99
    %v232 = vmul.f32 %v100, %v100
    %v233 = vmul.f32 %v101, %v101
    %v234 = vmul.f32 %v102, %v102
    %v235 = vmul.f32 %v103, %v103
    %v236 = vmul.f32 %v104, %v104
    %v237 = vmul.f32 %v105, %v105
    %v238 = vadd.f32 %v230, %v234
    %v239 = vadd.f32 %v231, %v235
    %v240 = vadd.f32 %v232, %v236
    %v241 = vadd.f32 %v233, %v237
    %v242 = vadd.f32 %v226, %v238
    %v243 = vadd.f32 %v227, %v239
    %v244 = vadd.f32 %v228, %v240
    %v245 = vadd.f32 %v229, %v241
    %246 = vst [vmem:[#allocation8] sm:$0xff] %v242
    %247 = vst [vmem:[#allocation8 + $0x8] sm:$0xff] %v243
    %248 = vst [vmem:[#allocation8 + $0x10] sm:$0xff] %v244
    %249 = vst [vmem:[#allocation8 + $0x18] sm:$0xff] %v245
    %v250 = vld [vmem:[#allocation9] sm:$0xff]
    %v251 = vld [vmem:[#allocation9 + $0x8] sm:$0xff]
    %v252 = vld [vmem:[#allocation9 + $0x10] sm:$0xff]
    %v253 = vld [vmem:[#allocation9 + $0x18] sm:$0xff]
    %v254 = vmul.f32 %v218, %v218
    %v255 = vmul.f32 %v219, %v219
    %v256 = vmul.f32 %v220, %v220
    %v257 = vmul.f32 %v221, %v221
    %v258 = vmul.f32 %v222, %v222
    %v259 = vmul.f32 %v223, %v223
    %v260 = vmul.f32 %v224, %v224
    %v261 = vmul.f32 %v225, %v225
    %v262 = vadd.f32 %v254, %v258
    %v263 = vadd.f32 %v255, %v259
    %v264 = vadd.f32 %v256, %v260
    %v265 = vadd.f32 %v257, %v261
    %v266 = vadd.f32 %v250, %v262
    %v267 = vadd.f32 %v251, %v263
    %v268 = vadd.f32 %v252, %v264
    %v269 = vadd.f32 %v253, %v265
    %270 = vst [vmem:[#allocation9] sm:$0xff] %v266
    %271 = vst [vmem:[#allocation9 + $0x8] sm:$0xff] %v267
    %272 = vst [vmem:[#allocation9 + $0x10] sm:$0xff] %v268
    %273 = vst [vmem:[#allocation9 + $0x18] sm:$0xff] %v269
    // Predicated region
    $region30: #{tpu_custom_call.1} parent=1 // pred_check
      _
    $region31: #{tpu_custom_call.1} parent=1 // pred_check_branch
      %275 = sbr.rel (0) target = $region33
    $region32: #{tpu_custom_call.1} parent=1 // pred_region
      %277 = vsyncadd [#allocation4], 0
      %s279 = sshll.u32 [#allocation8], 4
      %s280 = int_to_ptr.vmem [resolvable:$true] %s279
      %s281 = sshll.u32 %s3, 4
      %s282 = int_to_ptr.hbm [resolvable:$true] %s281
      %284 = dma.vmem_to_hbm [thread:$0]  %s280, 512, %s282, [#allocation4]
    $region33: #{tpu_custom_call.1} parent=1 // pred_fallthru
      _
    // Predicated region
    $region34: #{tpu_custom_call.1} parent=1 // pred_check
      _
    $region35: #{tpu_custom_call.1} parent=1 // pred_check_branch
      %286 = sbr.rel (0) target = $region37
    $region36: #{tpu_custom_call.1} parent=1 // pred_region
      %288 = vsyncadd [#allocation10], 0
      %s290 = sshll.u32 [#allocation9], 4
      %s291 = int_to_ptr.vmem [resolvable:$true] %s290
      %s292 = sshll.u32 %s4, 4
      %s293 = int_to_ptr.hbm [resolvable:$true] %s292
      %295 = dma.vmem_to_hbm [thread:$0]  %s291, 512, %s293, [#allocation10]
    $region37: #{tpu_custom_call.1} parent=1 // pred_fallthru
      _
    // Predicated region
    $region38: #{tpu_custom_call.1} parent=1 // pred_check
      _
    $region39: #{tpu_custom_call.1} parent=1 // pred_check_branch
      %297 = sbr.rel (0) target = $region41
    $region40: #{tpu_custom_call.1} parent=1 // pred_region
      %299 = dma.done [#allocation4], 512
    $region41: #{tpu_custom_call.1} parent=1 // pred_fallthru
      _
    // Predicated region
    $region42: #{tpu_custom_call.1} parent=1 // pred_check
      _
    $region43: #{tpu_custom_call.1} parent=1 // pred_check_branch
      %301 = sbr.rel (0) target = $region45
    $region44: #{tpu_custom_call.1} parent=1 // pred_region
      %303 = dma.done [#allocation10], 512
    $region45: #{tpu_custom_call.1} parent=1 // pred_fallthru
      _
    %304 = vsyncpa [#allocation3], 1
    %305 = vsyncpa [#allocation6], 1
    %306 = vsyncpa [#allocation4], 1
    %307 = vsyncpa [#allocation10], 1

</llo_original>
